<compile_context>
chip_gen: v6e
topology: v6e:2x2x1
jax: 0.10.0
libtpu: 0.0.40
codegen_flags: <defaults>
</compile_context>

<pallas_src>
import jax
import jax.numpy as jnp
import numpy as np
from jax.experimental import pallas as pl
from jax.experimental.pallas import tpu as pltpu

_EPS = 1e-6
_MAX_TILE_COLS = 16384            # 8 * 16384 = 131072 points per grid step
_VMEM_LIMIT_BYTES = 32 * 1024 * 1024   # default scoped VMEM is only 16 MiB on v5e


def _round_up(x, m):
    return ((x + m - 1) // m) * m


def _cdiv(a, b):
    return (a + b - 1) // b


# ----------------------------------------------------------------------------
# Kernel factory (closes over static sizes)
# ----------------------------------------------------------------------------
def _make_kernel(n_points, m_points, tile_cols, tile_m_cols,
                 total_cols, total_m_cols, steps):

    def kernel(data_ref, grad_ref, out_ref, accn_ref, accm_ref):
        c = pl.program_id(0)          # core-split axis ("parallel")
        i = pl.program_id(1)          # streaming axis ("arbitrary")

        # ---- zero the wide accumulators at the first step of this core ----
        @pl.when(i == 0)
        def _init():
            accn_ref[...] = jnp.zeros_like(accn_ref)
            accm_ref[...] = jnp.zeros_like(accm_ref)

        # ---- packed per-point tile: 8 channels x 8 dense sublanes ---------
        d = data_ref[...]                                  # (64, tile_cols)
        r0, r1, r2 = d[0:8, :], d[8:16, :], d[16:24, :]    # rgb
        g0, g1, g2 = d[24:32, :], d[32:40, :], d[40:48, :]  # gt
        acc = d[48:56, :]                                   # acc_map
        msk = d[56:64, :]                                   # off + 2*in

        # in-bounds mask: point index = row*total_cols + global_col < N
        col_start = (c * steps + i) * tile_cols
        row = jax.lax.broadcasted_iota(jnp.int32, (8, tile_cols), 0)
        col = jax.lax.broadcasted_iota(jnp.int32, (8, tile_cols), 1) + col_start
        inb = ((row * total_cols + col) < n_points).astype(jnp.float32)

        # masked L1 on rgb (NaN rows excluded, as in torch's nan_filter)
        nan_any = (r0 != r0) | (r1 != r1) | (r2 != r2)
        pvalid = jnp.where(nan_any, 0.0, inb)
        abs_sum = (jnp.abs(jnp.where(r0 != r0, 0.0, r0) - g0)
                   + jnp.abs(jnp.where(r1 != r1, 0.0, r1) - g1)
                   + jnp.abs(jnp.where(r2 != r2, 0.0, r2) - g2)) * pvalid

        # BCE-style entropy on acc_map (inb-masked so padded zeros don't leak)
        bce = (acc * jnp.log(acc + _EPS)
               + (1.0 - acc) * jnp.log(1.0 - acc + _EPS)) * inb

        # decode merged mask channel (values in {0,1,2,3}; padding is 0)
        in_m = jnp.where(msk >= 2.0, 1.0, 0.0)
        off_m = jnp.where((msk == 1.0) | (msk == 3.0), 1.0, 0.0)

        # ---- deferred reductions: plain vreg adds into wide scratch --------
        accn_ref[0:8, :] += abs_sum                       # rgb |diff| sum
        accn_ref[8:16, :] += pvalid                       # rgb valid count
        accn_ref[16:24, :] += bce                         # bce sum
        accn_ref[24:32, :] += jnp.abs(acc) * off_m        # opacity-sparse sum
        accn_ref[32:40, :] += off_m                       # off count
        accn_ref[40:48, :] += jnp.abs(acc - 1.0) * in_m   # in-shape sum
        accn_ref[48:56, :] += in_m                        # in count

        # ---- eikonal term on this core's grad tile -------------------------
        gd = grad_ref[...]                                 # (24, tile_m_cols)
        gx, gy, gz = gd[0:8, :], gd[8:16, :], gd[16:24, :]
        m_start = (c * steps + i) * tile_m_cols
        mrow = jax.lax.broadcasted_iota(jnp.int32, (8, tile_m_cols), 0)
        mcol = jax.lax.broadcasted_iota(jnp.int32, (8, tile_m_cols), 1) + m_start
        m_inb = ((mrow * total_m_cols + mcol) < m_points).astype(jnp.float32)
        nrm = jnp.sqrt(gx * gx + gy * gy + gz * gz)
        accm_ref[...] += ((nrm - 1.0) ** 2) * m_inb

        # ---- finalize: one cross-lane reduce per term, once per core -------
        @pl.when(i == steps - 1)
        def _finalize():
            def row_sum(x):                         # (8,T) -> (1,128) bcast
                return jnp.broadcast_to(jnp.sum(x, keepdims=True), (1, 128))
            out_ref[0:1, :] = row_sum(accn_ref[0:8, :])
            out_ref[1:2, :] = row_sum(accn_ref[8:16, :])
            out_ref[2:3, :] = row_sum(accn_ref[16:24, :])
            out_ref[3:4, :] = row_sum(accn_ref[24:32, :])
            out_ref[4:5, :] = row_sum(accn_ref[32:40, :])
            out_ref[5:6, :] = row_sum(accn_ref[40:48, :])
            out_ref[6:7, :] = row_sum(accn_ref[48:56, :])
            out_ref[7:8, :] = row_sum(accm_ref[...])

    return kernel


# ----------------------------------------------------------------------------
# jitted pipeline: channel-major pack + one pallas_call + scalar combine
# ----------------------------------------------------------------------------
@jax.jit
def _loss_pipeline(rgb_values, rgb_gt, grad_theta, acc_map, idx_off, idx_in,
                   morphing, weights):
    n = rgb_values.shape[0]
    m = grad_theta.shape[0]

    # ---- static tiling config (shapes are static under jit) ----------------
    cols0 = _cdiv(n, 8)
    m_cols0 = _cdiv(m, 8)
    steps = max(_cdiv(cols0, 2 * _MAX_TILE_COLS),
                _cdiv(m_cols0, 2 * _MAX_TILE_COLS), 1)
    tile_cols = _round_up(_cdiv(cols0, 2 * steps), 128)
    tile_m_cols = _round_up(_cdiv(m_cols0, 2 * steps), 128)
    total_cols = 2 * steps * tile_cols
    total_m_cols = 2 * steps * tile_m_cols

    f32 = jnp.float32

    def chan(x, total):
        x = x.astype(f32)
        x = jnp.pad(x, (0, 8 * total - x.shape[0]))
        return x.reshape(8, total)                # free row-major reshape

    mask_comb = idx_off.astype(f32) + 2.0 * idx_in.astype(f32)
    data = jnp.concatenate([
        chan(rgb_values[:, 0], total_cols), chan(rgb_values[:, 1], total_cols),
        chan(rgb_values[:, 2], total_cols),
        chan(rgb_gt[:, 0], total_cols), chan(rgb_gt[:, 1], total_cols),
        chan(rgb_gt[:, 2], total_cols),
        chan(acc_map, total_cols), chan(mask_comb, total_cols),
    ], axis=0)                                                  # (64, total_cols)

    grad = jnp.concatenate([
        chan(grad_theta[:, 0], total_m_cols),
        chan(grad_theta[:, 1], total_m_cols),
        chan(grad_theta[:, 2], total_m_cols),
    ], axis=0)                                                  # (24, total_m_cols)

    kernel = _make_kernel(n, m, tile_cols, tile_m_cols,
                          total_cols, total_m_cols, steps)

    partials = pl.pallas_call(
        kernel,
        out_shape=jax.ShapeDtypeStruct((16, 128), jnp.float32),
        grid=(2, steps),
        in_specs=[
            pl.BlockSpec((64, tile_cols), lambda c, i: (0, c * steps + i)),
            pl.BlockSpec((24, tile_m_cols), lambda c, i: (0, c * steps + i)),
        ],
        out_specs=pl.BlockSpec((8, 128), lambda c, i: (c, 0)),
        scratch_shapes=[
            pltpu.VMEM((56, tile_cols), jnp.float32),   # 7 wide accumulators
            pltpu.VMEM((8, tile_m_cols), jnp.float32),  # eikonal accumulator
        ],
        compiler_params=pltpu.CompilerParams(
            dimension_semantics=("parallel", "arbitrary"),
            vmem_limit_bytes=_VMEM_LIMIT_BYTES),
    )(data, grad)

    # ---- combine the two cores' partial sums + apply weights (fused scalar
    #      ops; NOTE: empty masks intentionally yield NaN/Inf, torch parity) --
    p = partials[0:8, 0] + partials[8:16, 0]           # (8,) per-term sums
    rgb_loss = p[0] / (p[1] * 3.0)
    bce_loss = (-2.0 / n) * p[2]
    op_loss = p[3] / p[4]
    in_loss = p[5] / p[6]
    eik_loss = p[7] / m
    geom = morphing.astype(f32)

    total = (rgb_loss + weights[0] * eik_loss + weights[1] * bce_loss
             + weights[2] * op_loss + weights[3] * in_loss + weights[4] * geom)

    return {
        'loss': total,
        'rgb_loss': rgb_loss,
        'eikonal_loss': eik_loss,
        'bce_loss': bce_loss,
        'opacity_sparse_loss': op_loss,
        'in_shape_loss': in_loss,
        'geometry_morphing_loss': geom,
    }


# ----------------------------------------------------------------------------
# Module-equivalent wrapper
# ----------------------------------------------------------------------------
class LossOpt:
    eikonal_weight = 0.1
    bce_weight = 0.01
    opacity_sparse_weight = 0.001
    in_shape_weight = 0.01
    geometry_morphing_weight = 0.1


def loss_forward(model_outputs, ground_truth, opt=LossOpt()):
    milestone = 200
    epoch = model_outputs['epoch']                 # python int
    curr = min(milestone, epoch)

    # epoch-dependent weights folded host-side and passed as runtime scalars
    # -> no recompile when the epoch changes
    weights = jnp.asarray(np.array([
        opt.eikonal_weight,
        opt.bce_weight,
        opt.opacity_sparse_weight * (1 + curr ** 2 / 40),
        opt.in_shape_weight * (1 - curr / milestone),
        opt.geometry_morphing_weight,
    ], dtype=np.float32))

    return _loss_pipeline(
        jnp.asarray(model_outputs['rgb_values'], jnp.float32),
        jnp.asarray(ground_truth['rgb'][0], jnp.float32),
        jnp.asarray(model_outputs['grad_theta'], jnp.float32),
        jnp.asarray(model_outputs['acc_map'], jnp.float32),
        jnp.asarray(model_outputs['index_off_surface']),
        jnp.asarray(model_outputs['index_in_surface']),
        jnp.asarray(model_outputs['morphing_distances'], jnp.float32),
        weights)


# ----------------------------------------------------------------------------
# Pure-JAX reference (mirrors the PyTorch forward) for verification
# ----------------------------------------------------------------------------
def loss_forward_ref(model_outputs, ground_truth, opt=LossOpt()):
    milestone, eps = 200, 1e-6
    rgb = model_outputs['rgb_values']
    gt = ground_truth['rgb'][0]
    nan_filter = ~jnp.any(jnp.isnan(rgb), axis=1)
    nf = nan_filter.astype(jnp.float32)[:, None]
    rgb_clean = jnp.where(jnp.isnan(rgb), 0.0, rgb)
    rgb_loss = jnp.sum(jnp.abs(rgb_clean - gt) * nf) / (jnp.sum(nf) * 3.0)
    g = model_outputs['grad_theta']
    eik = jnp.mean((jnp.linalg.norm(g, axis=-1) - 1.0) ** 2)
    a = model_outputs['acc_map']
    bce = -2.0 * jnp.mean(a * jnp.log(a + eps) + (1 - a) * jnp.log(1 - a + eps))
    off = model_outputs['index_off_surface'].astype(jnp.float32)
    op = jnp.sum(jnp.abs(a) * off) / jnp.sum(off)
    ins = model_outputs['index_in_surface'].astype(jnp.float32)
    insh = jnp.sum(jnp.abs(a - 1.0) * ins) / jnp.sum(ins)
    geom = jnp.asarray(model_outputs['morphing_distances'], jnp.float32)
    curr = min(milestone, model_outputs['epoch'])
    loss = (rgb_loss + opt.eikonal_weight * eik + opt.bce_weight * bce
            + opt.opacity_sparse_weight * (1 + curr ** 2 / 40) * op
            + opt.in_shape_weight * (1 - curr / milestone) * insh
            + opt.geometry_morphing_weight * geom)
    return {'loss': loss, 'rgb_loss': rgb_loss, 'eikonal_loss': eik,
            'bce_loss': bce, 'opacity_sparse_loss': op,
            'in_shape_loss': insh, 'geometry_morphing_loss': geom}


if __name__ == "__main__":
    key = jax.random.PRNGKey(0)
    N, M = 1000, 517   # deliberately non-multiples of 8 to exercise padding masks

    k1, k2, k3, k4, k5, k6 = jax.random.split(key, 6)
    rgb_values = jax.random.uniform(k1, (N, 3), jnp.float32)
    # inject a few NaN rows to exercise the nan_filter path
    rgb_values = rgb_values.at[7, 1].set(jnp.nan)
    rgb_values = rgb_values.at[123, 0].set(jnp.nan)
    rgb_gt = jax.random.uniform(k2, (N, 3), jnp.float32)
    grad_theta = jax.random.normal(k3, (M, 3), jnp.float32)
    acc_map = jax.random.uniform(k4, (N,), jnp.float32, minval=0.01, maxval=0.99)
    index_off_surface = jax.random.bernoulli(k5, 0.4, (N,))
    index_in_surface = jax.random.bernoulli(k6, 0.4, (N,))
    morphing_distances = jnp.float32(0.123)

    model_outputs = {
        'rgb_values': rgb_values,
        'grad_theta': grad_theta,
        'acc_map': acc_map,
        'index_off_surface': index_off_surface,
        'index_in_surface': index_in_surface,
        'morphing_distances': morphing_distances,
        'epoch': 50,
    }
    ground_truth = {'rgb': rgb_gt[None]}   # (1, N, 3), mimicking ground_truth['rgb'][0]

    out = loss_forward(model_outputs, ground_truth)
    jax.block_until_ready(out['loss'])

    ref = loss_forward_ref(model_outputs, ground_truth)
    for k in out:
        np.testing.assert_allclose(np.asarray(out[k]), np.asarray(ref[k]),
                                   rtol=1e-4, atol=1e-5)

    print("KERNEL_OK")
</pallas_src>

<mosaic_0001>
module attributes {stable_mosaic.version = 11 : i64} {
  func.func @kernel(%arg0: i32, %arg1: i32, %arg2: memref<64x128xf32, #tpu.memory_space<vmem>>, %arg3: memref<24x128xf32, #tpu.memory_space<vmem>>, %arg4: memref<8x128xf32, #tpu.memory_space<vmem>>, %arg5: memref<56x128xf32, #tpu.memory_space<vmem>>, %arg6: memref<8x128xf32, #tpu.memory_space<vmem>>) attributes {dimension_semantics = [#tpu.dimension_semantics<parallel>, #tpu.dimension_semantics<arbitrary>], iteration_bounds = array<i64: 2, 1>, scalar_prefetch = 0 : i64, scratch_operands = 2 : i64, tpu.core_type = #tpu.core_type<tc>, window_params = [{transform_indices = @transform_0, window_bounds = array<i64: 64, 128>}, {transform_indices = @transform_1, window_bounds = array<i64: 24, 128>}, {transform_indices = @transform_2, window_bounds = array<i64: 8, 128>}]} {
    %c0_i32 = arith.constant 0 : i32
    %0 = arith.cmpi eq, %arg1, %c0_i32 : i32
    %1 = arith.extui %0 : i1 to i32
    %c0_i32_0 = arith.constant 0 : i32
    %2 = arith.cmpi ne, %1, %c0_i32_0 : i32
    scf.if %2 {
      %cst_51 = arith.constant 0.000000e+00 : f32
      %139 = vector.broadcast %cst_51 : f32 to vector<56x128xf32>
      %c0_52 = arith.constant 0 : index
      %c0_53 = arith.constant 0 : index
      %140 = vector.load %arg5[%c0_52, %c0_53] : memref<56x128xf32, #tpu.memory_space<vmem>>, vector<56x128xf32>
      tpu.vector_store %arg5[%c0_52, %c0_53], %139 {strides = array<i32>} : memref<56x128xf32, #tpu.memory_space<vmem>>, vector<56x128xf32>,
      %cst_54 = arith.constant 0.000000e+00 : f32
      %141 = vector.broadcast %cst_54 : f32 to vector<8x128xf32>
      %c0_55 = arith.constant 0 : index
      %c0_56 = arith.constant 0 : index
      %142 = vector.load %arg6[%c0_55, %c0_56] : memref<8x128xf32, #tpu.memory_space<vmem>>, vector<8x128xf32>
      tpu.vector_store %arg6[%c0_55, %c0_56], %141 {strides = array<i32>} : memref<8x128xf32, #tpu.memory_space<vmem>>, vector<8x128xf32>,
    } else {
    }
    %c0 = arith.constant 0 : index
    %c0_1 = arith.constant 0 : index
    %3 = vector.load %arg2[%c0, %c0_1] : memref<64x128xf32, #tpu.memory_space<vmem>>, vector<64x128xf32>
    %4 = vector.extract_strided_slice %3 {offsets = [0, 0], sizes = [8, 128], strides = [1, 1]} : vector<64x128xf32> to vector<8x128xf32>
    %5 = vector.extract_strided_slice %3 {offsets = [8, 0], sizes = [8, 128], strides = [1, 1]} : vector<64x128xf32> to vector<8x128xf32>
    %6 = vector.extract_strided_slice %3 {offsets = [16, 0], sizes = [8, 128], strides = [1, 1]} : vector<64x128xf32> to vector<8x128xf32>
    %7 = vector.extract_strided_slice %3 {offsets = [24, 0], sizes = [8, 128], strides = [1, 1]} : vector<64x128xf32> to vector<8x128xf32>
    %8 = vector.extract_strided_slice %3 {offsets = [32, 0], sizes = [8, 128], strides = [1, 1]} : vector<64x128xf32> to vector<8x128xf32>
    %9 = vector.extract_strided_slice %3 {offsets = [40, 0], sizes = [8, 128], strides = [1, 1]} : vector<64x128xf32> to vector<8x128xf32>
    %10 = vector.extract_strided_slice %3 {offsets = [48, 0], sizes = [8, 128], strides = [1, 1]} : vector<64x128xf32> to vector<8x128xf32>
    %11 = vector.extract_strided_slice %3 {offsets = [56, 0], sizes = [8, 128], strides = [1, 1]} : vector<64x128xf32> to vector<8x128xf32>
    %c1_i32 = arith.constant 1 : i32
    %12 = arith.muli %arg0, %c1_i32 : i32
    %13 = arith.addi %12, %arg1 : i32
    %c128_i32 = arith.constant 128 : i32
    %14 = arith.muli %13, %c128_i32 : i32
    %15 = tpu.iota {dimensions = array<i32: 0>} : vector<8x128xi32>
    %16 = tpu.iota {dimensions = array<i32: 1>} : vector<8x128xi32>
    %17 = vector.broadcast %14 : i32 to vector<8x128xi32>
    %18 = arith.addi %16, %17 : vector<8x128xi32>
    %c256_i32 = arith.constant 256 : i32
    %19 = vector.broadcast %c256_i32 : i32 to vector<8x128xi32>
    %20 = arith.muli %15, %19 : vector<8x128xi32>
    %21 = arith.addi %20, %18 : vector<8x128xi32>
    %c1000_i32 = arith.constant 1000 : i32
    %22 = vector.broadcast %c1000_i32 : i32 to vector<8x128xi32>
    %23 = arith.cmpi slt, %21, %22 : vector<8x128xi32>
    %24 = arith.extui %23 : vector<8x128xi1> to vector<8x128xi32>
    %25 = arith.sitofp %24 : vector<8x128xi32> to vector<8x128xf32>
    %26 = arith.cmpf one, %4, %4 : vector<8x128xf32>
    %27 = arith.cmpf one, %5, %5 : vector<8x128xf32>
    %28 = arith.ori %26, %27 : vector<8x128xi1>
    %29 = arith.cmpf one, %6, %6 : vector<8x128xf32>
    %30 = arith.ori %28, %29 : vector<8x128xi1>
    %cst = arith.constant 0.000000e+00 : f32
    %31 = vector.broadcast %cst : f32 to vector<8x128xf32>
    %32 = arith.select %30, %31, %25 : vector<8x128xi1>, vector<8x128xf32>
    %33 = arith.cmpf one, %4, %4 : vector<8x128xf32>
    %cst_2 = arith.constant 0.000000e+00 : f32
    %34 = vector.broadcast %cst_2 : f32 to vector<8x128xf32>
    %35 = arith.select %33, %34, %4 : vector<8x128xi1>, vector<8x128xf32>
    %36 = arith.subf %35, %7 : vector<8x128xf32>
    %37 = math.absf %36 : vector<8x128xf32>
    %38 = arith.cmpf one, %5, %5 : vector<8x128xf32>
    %cst_3 = arith.constant 0.000000e+00 : f32
    %39 = vector.broadcast %cst_3 : f32 to vector<8x128xf32>
    %40 = arith.select %38, %39, %5 : vector<8x128xi1>, vector<8x128xf32>
    %41 = arith.subf %40, %8 : vector<8x128xf32>
    %42 = math.absf %41 : vector<8x128xf32>
    %43 = arith.addf %37, %42 : vector<8x128xf32>
    %44 = arith.cmpf one, %6, %6 : vector<8x128xf32>
    %cst_4 = arith.constant 0.000000e+00 : f32
    %45 = vector.broadcast %cst_4 : f32 to vector<8x128xf32>
    %46 = arith.select %44, %45, %6 : vector<8x128xi1>, vector<8x128xf32>
    %47 = arith.subf %46, %9 : vector<8x128xf32>
    %48 = math.absf %47 : vector<8x128xf32>
    %49 = arith.addf %43, %48 : vector<8x128xf32>
    %50 = arith.mulf %49, %32 : vector<8x128xf32>
    %cst_5 = arith.constant 9.99999997E-7 : f32
    %51 = vector.broadcast %cst_5 : f32 to vector<8x128xf32>
    %52 = arith.addf %10, %51 : vector<8x128xf32>
    %53 = math.log %52 : vector<8x128xf32>
    %54 = arith.mulf %10, %53 : vector<8x128xf32>
    %cst_6 = arith.constant 1.000000e+00 : f32
    %55 = vector.broadcast %cst_6 : f32 to vector<8x128xf32>
    %56 = arith.subf %55, %10 : vector<8x128xf32>
    %cst_7 = arith.constant 1.000000e+00 : f32
    %57 = vector.broadcast %cst_7 : f32 to vector<8x128xf32>
    %58 = arith.subf %57, %10 : vector<8x128xf32>
    %cst_8 = arith.constant 9.99999997E-7 : f32
    %59 = vector.broadcast %cst_8 : f32 to vector<8x128xf32>
    %60 = arith.addf %58, %59 : vector<8x128xf32>
    %61 = math.log %60 : vector<8x128xf32>
    %62 = arith.mulf %56, %61 : vector<8x128xf32>
    %63 = arith.addf %54, %62 : vector<8x128xf32>
    %64 = arith.mulf %63, %25 : vector<8x128xf32>
    %cst_9 = arith.constant 2.000000e+00 : f32
    %65 = vector.broadcast %cst_9 : f32 to vector<8x128xf32>
    %66 = arith.cmpf oge, %11, %65 : vector<8x128xf32>
    %cst_10 = arith.constant 1.000000e+00 : f32
    %cst_11 = arith.constant 0.000000e+00 : f32
    %67 = vector.broadcast %cst_10 : f32 to vector<8x128xf32>
    %68 = vector.broadcast %cst_11 : f32 to vector<8x128xf32>
    %69 = arith.select %66, %67, %68 : vector<8x128xi1>, vector<8x128xf32>
    %cst_12 = arith.constant 1.000000e+00 : f32
    %70 = vector.broadcast %cst_12 : f32 to vector<8x128xf32>
    %71 = arith.cmpf oeq, %11, %70 : vector<8x128xf32>
    %cst_13 = arith.constant 3.000000e+00 : f32
    %72 = vector.broadcast %cst_13 : f32 to vector<8x128xf32>
    %73 = arith.cmpf oeq, %11, %72 : vector<8x128xf32>
    %74 = arith.ori %71, %73 : vector<8x128xi1>
    %cst_14 = arith.constant 1.000000e+00 : f32
    %cst_15 = arith.constant 0.000000e+00 : f32
    %75 = vector.broadcast %cst_14 : f32 to vector<8x128xf32>
    %76 = vector.broadcast %cst_15 : f32 to vector<8x128xf32>
    %77 = arith.select %74, %75, %76 : vector<8x128xi1>, vector<8x128xf32>
    %c0_16 = arith.constant 0 : index
    %c0_17 = arith.constant 0 : index
    %78 = vector.load %arg5[%c0_16, %c0_17] : memref<56x128xf32, #tpu.memory_space<vmem>>, vector<8x128xf32>
    %79 = arith.addf %78, %50 : vector<8x128xf32>
    %c0_18 = arith.constant 0 : index
    %c0_19 = arith.constant 0 : index
    %80 = vector.load %arg5[%c0_18, %c0_19] : memref<56x128xf32, #tpu.memory_space<vmem>>, vector<8x128xf32>
    tpu.vector_store %arg5[%c0_18, %c0_19], %79 {strides = array<i32>} : memref<56x128xf32, #tpu.memory_space<vmem>>, vector<8x128xf32>,
    %c8 = arith.constant 8 : index
    %c0_20 = arith.constant 0 : index
    %81 = vector.load %arg5[%c8, %c0_20] : memref<56x128xf32, #tpu.memory_space<vmem>>, vector<8x128xf32>
    %82 = arith.addf %81, %32 : vector<8x128xf32>
    %c8_21 = arith.constant 8 : index
    %c0_22 = arith.constant 0 : index
    %83 = vector.load %arg5[%c8_21, %c0_22] : memref<56x128xf32, #tpu.memory_space<vmem>>, vector<8x128xf32>
    tpu.vector_store %arg5[%c8_21, %c0_22], %82 {strides = array<i32>} : memref<56x128xf32, #tpu.memory_space<vmem>>, vector<8x128xf32>,
    %c16 = arith.constant 16 : index
    %c0_23 = arith.constant 0 : index
    %84 = vector.load %arg5[%c16, %c0_23] : memref<56x128xf32, #tpu.memory_space<vmem>>, vector<8x128xf32>
    %85 = arith.addf %84, %64 : vector<8x128xf32>
    %c16_24 = arith.constant 16 : index
    %c0_25 = arith.constant 0 : index
    %86 = vector.load %arg5[%c16_24, %c0_25] : memref<56x128xf32, #tpu.memory_space<vmem>>, vector<8x128xf32>
    tpu.vector_store %arg5[%c16_24, %c0_25], %85 {strides = array<i32>} : memref<56x128xf32, #tpu.memory_space<vmem>>, vector<8x128xf32>,
    %c24 = arith.constant 24 : index
    %c0_26 = arith.constant 0 : index
    %87 = vector.load %arg5[%c24, %c0_26] : memref<56x128xf32, #tpu.memory_space<vmem>>, vector<8x128xf32>
    %88 = math.absf %10 : vector<8x128xf32>
    %89 = arith.mulf %88, %77 : vector<8x128xf32>
    %90 = arith.addf %87, %89 : vector<8x128xf32>
    %c24_27 = arith.constant 24 : index
    %c0_28 = arith.constant 0 : index
    %91 = vector.load %arg5[%c24_27, %c0_28] : memref<56x128xf32, #tpu.memory_space<vmem>>, vector<8x128xf32>
    tpu.vector_store %arg5[%c24_27, %c0_28], %90 {strides = array<i32>} : memref<56x128xf32, #tpu.memory_space<vmem>>, vector<8x128xf32>,
    %c32 = arith.constant 32 : index
    %c0_29 = arith.constant 0 : index
    %92 = vector.load %arg5[%c32, %c0_29] : memref<56x128xf32, #tpu.memory_space<vmem>>, vector<8x128xf32>
    %93 = arith.addf %92, %77 : vector<8x128xf32>
    %c32_30 = arith.constant 32 : index
    %c0_31 = arith.constant 0 : index
    %94 = vector.load %arg5[%c32_30, %c0_31] : memref<56x128xf32, #tpu.memory_space<vmem>>, vector<8x128xf32>
    tpu.vector_store %arg5[%c32_30, %c0_31], %93 {strides = array<i32>} : memref<56x128xf32, #tpu.memory_space<vmem>>, vector<8x128xf32>,
    %c40 = arith.constant 40 : index
    %c0_32 = arith.constant 0 : index
    %95 = vector.load %arg5[%c40, %c0_32] : memref<56x128xf32, #tpu.memory_space<vmem>>, vector<8x128xf32>
    %cst_33 = arith.constant 1.000000e+00 : f32
    %96 = vector.broadcast %cst_33 : f32 to vector<8x128xf32>
    %97 = arith.subf %10, %96 : vector<8x128xf32>
    %98 = math.absf %97 : vector<8x128xf32>
    %99 = arith.mulf %98, %69 : vector<8x128xf32>
    %100 = arith.addf %95, %99 : vector<8x128xf32>
    %c40_34 = arith.constant 40 : index
    %c0_35 = arith.constant 0 : index
    %101 = vector.load %arg5[%c40_34, %c0_35] : memref<56x128xf32, #tpu.memory_space<vmem>>, vector<8x128xf32>
    tpu.vector_store %arg5[%c40_34, %c0_35], %100 {strides = array<i32>} : memref<56x128xf32, #tpu.memory_space<vmem>>, vector<8x128xf32>,
    %c48 = arith.constant 48 : index
    %c0_36 = arith.constant 0 : index
    %102 = vector.load %arg5[%c48, %c0_36] : memref<56x128xf32, #tpu.memory_space<vmem>>, vector<8x128xf32>
    %103 = arith.addf %102, %69 : vector<8x128xf32>
    %c48_37 = arith.constant 48 : index
    %c0_38 = arith.constant 0 : index
    %104 = vector.load %arg5[%c48_37, %c0_38] : memref<56x128xf32, #tpu.memory_space<vmem>>, vector<8x128xf32>
    tpu.vector_store %arg5[%c48_37, %c0_38], %103 {strides = array<i32>} : memref<56x128xf32, #tpu.memory_space<vmem>>, vector<8x128xf32>,
    %c0_39 = arith.constant 0 : index
    %c0_40 = arith.constant 0 : index
    %105 = vector.load %arg3[%c0_39, %c0_40] : memref<24x128xf32, #tpu.memory_space<vmem>>, vector<24x128xf32>
    %106 = vector.extract_strided_slice %105 {offsets = [0, 0], sizes = [8, 128], strides = [1, 1]} : vector<24x128xf32> to vector<8x128xf32>
    %107 = vector.extract_strided_slice %105 {offsets = [8, 0], sizes = [8, 128], strides = [1, 1]} : vector<24x128xf32> to vector<8x128xf32>
    %108 = vector.extract_strided_slice %105 {offsets = [16, 0], sizes = [8, 128], strides = [1, 1]} : vector<24x128xf32> to vector<8x128xf32>
    %c1_i32_41 = arith.constant 1 : i32
    %109 = arith.muli %arg0, %c1_i32_41 : i32
    %110 = arith.addi %109, %arg1 : i32
    %c128_i32_42 = arith.constant 128 : i32
    %111 = arith.muli %110, %c128_i32_42 : i32
    %112 = tpu.iota {dimensions = array<i32: 0>} : vector<8x128xi32>
    %113 = tpu.iota {dimensions = array<i32: 1>} : vector<8x128xi32>
    %114 = vector.broadcast %111 : i32 to vector<8x128xi32>
    %115 = arith.addi %113, %114 : vector<8x128xi32>
    %c256_i32_43 = arith.constant 256 : i32
    %116 = vector.broadcast %c256_i32_43 : i32 to vector<8x128xi32>
    %117 = arith.muli %112, %116 : vector<8x128xi32>
    %118 = arith.addi %117, %115 : vector<8x128xi32>
    %c517_i32 = arith.constant 517 : i32
    %119 = vector.broadcast %c517_i32 : i32 to vector<8x128xi32>
    %120 = arith.cmpi slt, %118, %119 : vector<8x128xi32>
    %121 = arith.extui %120 : vector<8x128xi1> to vector<8x128xi32>
    %122 = arith.sitofp %121 : vector<8x128xi32> to vector<8x128xf32>
    %123 = arith.mulf %106, %106 : vector<8x128xf32>
    %124 = arith.mulf %107, %107 : vector<8x128xf32>
    %125 = arith.addf %123, %124 : vector<8x128xf32>
    %126 = arith.mulf %108, %108 : vector<8x128xf32>
    %127 = arith.addf %125, %126 : vector<8x128xf32>
    %128 = math.sqrt %127 : vector<8x128xf32>
    %c0_44 = arith.constant 0 : index
    %c0_45 = arith.constant 0 : index
    %129 = vector.load %arg6[%c0_44, %c0_45] : memref<8x128xf32, #tpu.memory_space<vmem>>, vector<8x128xf32>
    %cst_46 = arith.constant 1.000000e+00 : f32
    %130 = vector.broadcast %cst_46 : f32 to vector<8x128xf32>
    %131 = arith.subf %128, %130 : vector<8x128xf32>
    %132 = arith.mulf %131, %131 : vector<8x128xf32>
    %133 = arith.mulf %132, %122 : vector<8x128xf32>
    %134 = arith.addf %129, %133 : vector<8x128xf32>
    %c0_47 = arith.constant 0 : index
    %c0_48 = arith.constant 0 : index
    %135 = vector.load %arg6[%c0_47, %c0_48] : memref<8x128xf32, #tpu.memory_space<vmem>>, vector<8x128xf32>
    tpu.vector_store %arg6[%c0_47, %c0_48], %134 {strides = array<i32>} : memref<8x128xf32, #tpu.memory_space<vmem>>, vector<8x128xf32>,
    %c0_i32_49 = arith.constant 0 : i32
    %136 = arith.cmpi eq, %arg1, %c0_i32_49 : i32
    %137 = arith.extui %136 : i1 to i32
    %c0_i32_50 = arith.constant 0 : i32
    %138 = arith.cmpi ne, %137, %c0_i32_50 : i32
    scf.if %138 {
      %c0_51 = arith.constant 0 : index
      %c0_52 = arith.constant 0 : index
      %139 = vector.load %arg5[%c0_51, %c0_52] : memref<56x128xf32, #tpu.memory_space<vmem>>, vector<8x128xf32>
      %140 = vector.shape_cast %139 : vector<8x128xf32> to vector<1x8x128xf32>
      %cst_53 = arith.constant dense<0.000000e+00> : vector<1xf32>
      %141 = vector.multi_reduction <add>, %140, %cst_53 [1, 2] : vector<1x8x128xf32> to vector<1xf32>
      %142 = vector.shape_cast %141 : vector<1xf32> to vector<1x1x1xf32>
      %143 = vector.extract %142[0, 0, 0] : f32 from vector<1x1x1xf32>
      %144 = vector.broadcast %143 : f32 to vector<1x1xf32>
      %145 = vector.shape_cast %144 : vector<1x1xf32> to vector<1x1xf32>
      %146 = vector.broadcast %145 : vector<1x1xf32> to vector<1x128xf32>
      %c0_54 = arith.constant 0 : index
      %c0_55 = arith.constant 0 : index
      %147 = vector.load %arg4[%c0_54, %c0_55] : memref<8x128xf32, #tpu.memory_space<vmem>>, vector<1x128xf32>
      tpu.vector_store %arg4[%c0_54, %c0_55], %146 {strides = array<i32>} : memref<8x128xf32, #tpu.memory_space<vmem>>, vector<1x128xf32>,
      %c8_56 = arith.constant 8 : index
      %c0_57 = arith.constant 0 : index
      %148 = vector.load %arg5[%c8_56, %c0_57] : memref<56x128xf32, #tpu.memory_space<vmem>>, vector<8x128xf32>
      %149 = vector.shape_cast %148 : vector<8x128xf32> to vector<1x8x128xf32>
      %cst_58 = arith.constant dense<0.000000e+00> : vector<1xf32>
      %150 = vector.multi_reduction <add>, %149, %cst_58 [1, 2] : vector<1x8x128xf32> to vector<1xf32>
      %151 = vector.shape_cast %150 : vector<1xf32> to vector<1x1x1xf32>
      %152 = vector.extract %151[0, 0, 0] : f32 from vector<1x1x1xf32>
      %153 = vector.broadcast %152 : f32 to vector<1x1xf32>
      %154 = vector.shape_cast %153 : vector<1x1xf32> to vector<1x1xf32>
      %155 = vector.broadcast %154 : vector<1x1xf32> to vector<1x128xf32>
      %c1 = arith.constant 1 : index
      %c0_59 = arith.constant 0 : index
      %156 = vector.load %arg4[%c1, %c0_59] : memref<8x128xf32, #tpu.memory_space<vmem>>, vector<1x128xf32>
      tpu.vector_store %arg4[%c1, %c0_59], %155 {strides = array<i32>} : memref<8x128xf32, #tpu.memory_space<vmem>>, vector<1x128xf32>,
      %c16_60 = arith.constant 16 : index
      %c0_61 = arith.constant 0 : index
      %157 = vector.load %arg5[%c16_60, %c0_61] : memref<56x128xf32, #tpu.memory_space<vmem>>, vector<8x128xf32>
      %158 = vector.shape_cast %157 : vector<8x128xf32> to vector<1x8x128xf32>
      %cst_62 = arith.constant dense<0.000000e+00> : vector<1xf32>
      %159 = vector.multi_reduction <add>, %158, %cst_62 [1, 2] : vector<1x8x128xf32> to vector<1xf32>
      %160 = vector.shape_cast %159 : vector<1xf32> to vector<1x1x1xf32>
      %161 = vector.extract %160[0, 0, 0] : f32 from vector<1x1x1xf32>
      %162 = vector.broadcast %161 : f32 to vector<1x1xf32>
      %163 = vector.shape_cast %162 : vector<1x1xf32> to vector<1x1xf32>
      %164 = vector.broadcast %163 : vector<1x1xf32> to vector<1x128xf32>
      %c2 = arith.constant 2 : index
      %c0_63 = arith.constant 0 : index
      %165 = vector.load %arg4[%c2, %c0_63] : memref<8x128xf32, #tpu.memory_space<vmem>>, vector<1x128xf32>
      tpu.vector_store %arg4[%c2, %c0_63], %164 {strides = array<i32>} : memref<8x128xf32, #tpu.memory_space<vmem>>, vector<1x128xf32>,
      %c24_64 = arith.constant 24 : index
      %c0_65 = arith.constant 0 : index
      %166 = vector.load %arg5[%c24_64, %c0_65] : memref<56x128xf32, #tpu.memory_space<vmem>>, vector<8x128xf32>
      %167 = vector.shape_cast %166 : vector<8x128xf32> to vector<1x8x128xf32>
      %cst_66 = arith.constant dense<0.000000e+00> : vector<1xf32>
      %168 = vector.multi_reduction <add>, %167, %cst_66 [1, 2] : vector<1x8x128xf32> to vector<1xf32>
      %169 = vector.shape_cast %168 : vector<1xf32> to vector<1x1x1xf32>
      %170 = vector.extract %169[0, 0, 0] : f32 from vector<1x1x1xf32>
      %171 = vector.broadcast %170 : f32 to vector<1x1xf32>
      %172 = vector.shape_cast %171 : vector<1x1xf32> to vector<1x1xf32>
      %173 = vector.broadcast %172 : vector<1x1xf32> to vector<1x128xf32>
      %c3 = arith.constant 3 : index
      %c0_67 = arith.constant 0 : index
      %174 = vector.load %arg4[%c3, %c0_67] : memref<8x128xf32, #tpu.memory_space<vmem>>, vector<1x128xf32>
      tpu.vector_store %arg4[%c3, %c0_67], %173 {strides = array<i32>} : memref<8x128xf32, #tpu.memory_space<vmem>>, vector<1x128xf32>,
      %c32_68 = arith.constant 32 : index
      %c0_69 = arith.constant 0 : index
      %175 = vector.load %arg5[%c32_68, %c0_69] : memref<56x128xf32, #tpu.memory_space<vmem>>, vector<8x128xf32>
      %176 = vector.shape_cast %175 : vector<8x128xf32> to vector<1x8x128xf32>
      %cst_70 = arith.constant dense<0.000000e+00> : vector<1xf32>
      %177 = vector.multi_reduction <add>, %176, %cst_70 [1, 2] : vector<1x8x128xf32> to vector<1xf32>
      %178 = vector.shape_cast %177 : vector<1xf32> to vector<1x1x1xf32>
      %179 = vector.extract %178[0, 0, 0] : f32 from vector<1x1x1xf32>
      %180 = vector.broadcast %179 : f32 to vector<1x1xf32>
      %181 = vector.shape_cast %180 : vector<1x1xf32> to vector<1x1xf32>
      %182 = vector.broadcast %181 : vector<1x1xf32> to vector<1x128xf32>
      %c4 = arith.constant 4 : index
      %c0_71 = arith.constant 0 : index
      %183 = vector.load %arg4[%c4, %c0_71] : memref<8x128xf32, #tpu.memory_space<vmem>>, vector<1x128xf32>
      tpu.vector_store %arg4[%c4, %c0_71], %182 {strides = array<i32>} : memref<8x128xf32, #tpu.memory_space<vmem>>, vector<1x128xf32>,
      %c40_72 = arith.constant 40 : index
      %c0_73 = arith.constant 0 : index
      %184 = vector.load %arg5[%c40_72, %c0_73] : memref<56x128xf32, #tpu.memory_space<vmem>>, vector<8x128xf32>
      %185 = vector.shape_cast %184 : vector<8x128xf32> to vector<1x8x128xf32>
      %cst_74 = arith.constant dense<0.000000e+00> : vector<1xf32>
      %186 = vector.multi_reduction <add>, %185, %cst_74 [1, 2] : vector<1x8x128xf32> to vector<1xf32>
      %187 = vector.shape_cast %186 : vector<1xf32> to vector<1x1x1xf32>
      %188 = vector.extract %187[0, 0, 0] : f32 from vector<1x1x1xf32>
      %189 = vector.broadcast %188 : f32 to vector<1x1xf32>
      %190 = vector.shape_cast %189 : vector<1x1xf32> to vector<1x1xf32>
      %191 = vector.broadcast %190 : vector<1x1xf32> to vector<1x128xf32>
      %c5 = arith.constant 5 : index
      %c0_75 = arith.constant 0 : index
      %192 = vector.load %arg4[%c5, %c0_75] : memref<8x128xf32, #tpu.memory_space<vmem>>, vector<1x128xf32>
      tpu.vector_store %arg4[%c5, %c0_75], %191 {strides = array<i32>} : memref<8x128xf32, #tpu.memory_space<vmem>>, vector<1x128xf32>,
      %c48_76 = arith.constant 48 : index
      %c0_77 = arith.constant 0 : index
      %193 = vector.load %arg5[%c48_76, %c0_77] : memref<56x128xf32, #tpu.memory_space<vmem>>, vector<8x128xf32>
      %194 = vector.shape_cast %193 : vector<8x128xf32> to vector<1x8x128xf32>
      %cst_78 = arith.constant dense<0.000000e+00> : vector<1xf32>
      %195 = vector.multi_reduction <add>, %194, %cst_78 [1, 2] : vector<1x8x128xf32> to vector<1xf32>
      %196 = vector.shape_cast %195 : vector<1xf32> to vector<1x1x1xf32>
      %197 = vector.extract %196[0, 0, 0] : f32 from vector<1x1x1xf32>
      %198 = vector.broadcast %197 : f32 to vector<1x1xf32>
      %199 = vector.shape_cast %198 : vector<1x1xf32> to vector<1x1xf32>
      %200 = vector.broadcast %199 : vector<1x1xf32> to vector<1x128xf32>
      %c6 = arith.constant 6 : index
      %c0_79 = arith.constant 0 : index
      %201 = vector.load %arg4[%c6, %c0_79] : memref<8x128xf32, #tpu.memory_space<vmem>>, vector<1x128xf32>
      tpu.vector_store %arg4[%c6, %c0_79], %200 {strides = array<i32>} : memref<8x128xf32, #tpu.memory_space<vmem>>, vector<1x128xf32>,
      %c0_80 = arith.constant 0 : index
      %c0_81 = arith.constant 0 : index
      %202 = vector.load %arg6[%c0_80, %c0_81] : memref<8x128xf32, #tpu.memory_space<vmem>>, vector<8x128xf32>
      %203 = vector.shape_cast %202 : vector<8x128xf32> to vector<1x8x128xf32>
      %cst_82 = arith.constant dense<0.000000e+00> : vector<1xf32>
      %204 = vector.multi_reduction <add>, %203, %cst_82 [1, 2] : vector<1x8x128xf32> to vector<1xf32>
      %205 = vector.shape_cast %204 : vector<1xf32> to vector<1x1x1xf32>
      %206 = vector.extract %205[0, 0, 0] : f32 from vector<1x1x1xf32>
      %207 = vector.broadcast %206 : f32 to vector<1x1xf32>
      %208 = vector.shape_cast %207 : vector<1x1xf32> to vector<1x1xf32>
      %209 = vector.broadcast %208 : vector<1x1xf32> to vector<1x128xf32>
      %c7 = arith.constant 7 : index
      %c0_83 = arith.constant 0 : index
      %210 = vector.load %arg4[%c7, %c0_83] : memref<8x128xf32, #tpu.memory_space<vmem>>, vector<1x128xf32>
      tpu.vector_store %arg4[%c7, %c0_83], %209 {strides = array<i32>} : memref<8x128xf32, #tpu.memory_space<vmem>>, vector<1x128xf32>,
    } else {
    }
    return
  }
  func.func @transform_0(%arg0: i32, %arg1: i32) -> (i32, i32) {
    %c1_i32 = arith.constant 1 : i32
    %0 = arith.muli %arg0, %c1_i32 : i32
    %1 = arith.addi %0, %arg1 : i32
    %c0_i32 = arith.constant 0 : i32
    %c0_i32_0 = arith.constant 0 : i32
    return %c0_i32, %1 : i32, i32
  }
  func.func @transform_1(%arg0: i32, %arg1: i32) -> (i32, i32) {
    %c1_i32 = arith.constant 1 : i32
    %0 = arith.muli %arg0, %c1_i32 : i32
    %1 = arith.addi %0, %arg1 : i32
    %c0_i32 = arith.constant 0 : i32
    %c0_i32_0 = arith.constant 0 : i32
    return %c0_i32, %1 : i32, i32
  }
  func.func @transform_2(%arg0: i32, %arg1: i32) -> (i32, i32) {
    %c0_i32 = arith.constant 0 : i32
    %c0_i32_0 = arith.constant 0 : i32
    return %arg0, %c0_i32 : i32, i32
  }
}

</mosaic_0001>

<llo_original>
// kernel: _loss_pipeline.1
$region0: #{_loss_pipeline.1}
  #allocation0 [shape = 'u32[]', space=smem, size = 0x4, offset = 0x4, fixed_abs, tag = 'smem constant byte address 0x4 - core index']
  #allocation1 [shape = 'u32[144,128]{1,0:T(1,128)}', space=vmem, size = 0x12000, scoped, tag = 'internal scratch']
  #allocation2 [shape = 'f32[56,128]{1,0:T(8,128)}', space=vmem, size = 0x7000, scoped, tag = 'scratch operand']
  #allocation3 [shape = 'f32[8,128]{1,0:T(8,128)}', space=vmem, size = 0x1000, scoped, tag = 'scratch operand']
  %s0 = inlined_call_operand.vmem [shape: f32[64,256], index: 0, kind: input, shape index: {}]
  %s1 = inlined_call_operand.vmem [shape: f32[24,256], index: 1, kind: input, shape index: {}]
  %s2 = inlined_call_operand.vmem [shape: f32[16,128], index: 2, kind: output, shape index: {}]
  %s3 = sld [smem:[#allocation0]]
  $region125: #{_loss_pipeline.1} parent=0
    _
  %s5 = ssub.s32 1, %s3
  %s6 = scalar_select 0, %s5, %s3
  $region1: #{_loss_pipeline.1} parent=0
    #allocation4 [shape = 'u8[65536]{0}', space=vmem, size = 0x10000, scoped, tag = 'input window, operand 0']
    #allocation5 [shape = 'u8[24576]{0}', space=vmem, size = 0x6000, scoped, tag = 'input window, operand 1']
    loop: start=0, step=1, limit=4
    $region2: #{_loss_pipeline.1} parent=1 // loop_pre_header
      _
    $region3: #{_loss_pipeline.1} parent=1 // loop_header
      %s8 = sphi 0, %s12
      %p9 = scmp.ge.s32.totalorder %s8, 4
      %s15 = sphi 0, %s27
      %s16 = sphi 0, %s23
      %s17 = sphi 0, %s15
      %s18 = sphi 0, %s16
      %s19 = sphi 0, %s17
      %s20 = sphi 0, %s18
      %s32 = sphi 0, %s34
      %s35 = sphi 0, %s32
      %s36 = sphi 0, %s35
      %s52 = sphi 0, %s36
      %s60 = sphi 0, %s62
      %s63 = sphi 0, %s60
      %s64 = sphi 0, %s63
      %s80 = sphi 0, %s64
      %s86 = sphi 0, %s88
      %s89 = sphi 0, %s86
      %s90 = sphi 0, %s89
      %s106 = sphi 0, %s90
    $region4: #{_loss_pipeline.1} parent=1 // loop_header_branch
      %11 = sbr.rel (%p9) target = $region8
    $region5: #{_loss_pipeline.1} parent=1 // loop_body
      %s13 = ssub.s32 %s8, 1
      %s14 = ssub.s32 %s8, 2
      %s21 = sadd.s32 1, %s16
      %p22 = scmp.ge.s32.totalorder %s21, 1
      %s23 = scalar_select %p22, 0, %s21
      %s24 = sadd.s32 1, %s15
      %s25 = scalar_select %p22, %s24, %s15
      %p26 = scmp.ge.s32.totalorder %s25, 2
      %s27 = scalar_select %p26, 0, %s25
      %s28 = sadd.s32 %s15, %s16
      %s29 = sadd.s32 %s27, %s23
      %s30 = ssub.s32 %s28, %s29
      %p31 = scmp.eq.s32.totalorder %s30, 0
      %s33 = sadd.s32 %s32, 1
      %s34 = scalar_select %p31, %s32, %s33
      %p37 = pneg %p31
      %p38 = scmp.eq.s32.totalorder %s8, 1
      %p39 = por %p37, %p38
      %p40 = scmp.ne.s32.totalorder %s32, %s35
      %p41 = scmp.eq.s32.totalorder %s8, 0
      %p42 = por %p40, %p41
      %p43 = scmp.ne.s32.totalorder %s32, %s35
      %p44 = scmp.eq.s32.totalorder %s13, 1
      %p45 = por %p43, %p44
      %p46 = scmp.ne.s32.totalorder %s35, %s36
      %p47 = scmp.eq.s32.totalorder %s13, 0
      %p48 = por %p46, %p47
      %p49 = scmp.ne.s32.totalorder %s35, %s36
      %p50 = scmp.eq.s32.totalorder %s14, 1
      %p51 = por %p49, %p50
      %p53 = scmp.ne.s32.totalorder %s36, %s52
      %p54 = scmp.eq.s32.totalorder %s14, 0
      %p55 = por %p53, %p54
      %s56 = sadd.s32 %s15, %s16
      %s57 = sadd.s32 %s27, %s23
      %s58 = ssub.s32 %s56, %s57
      %p59 = scmp.eq.s32.totalorder %s58, 0
      %s61 = sadd.s32 %s60, 1
      %s62 = scalar_select %p59, %s60, %s61
      %p65 = pneg %p59
      %p66 = scmp.eq.s32.totalorder %s8, 1
      %p67 = por %p65, %p66
      %p68 = scmp.ne.s32.totalorder %s60, %s63
      %p69 = scmp.eq.s32.totalorder %s8, 0
      %p70 = por %p68, %p69
      %p71 = scmp.ne.s32.totalorder %s60, %s63
      %p72 = scmp.eq.s32.totalorder %s13, 1
      %p73 = por %p71, %p72
      %p74 = scmp.ne.s32.totalorder %s63, %s64
      %p75 = scmp.eq.s32.totalorder %s13, 0
      %p76 = por %p74, %p75
      %p77 = scmp.ne.s32.totalorder %s63, %s64
      %p78 = scmp.eq.s32.totalorder %s14, 1
      %p79 = por %p77, %p78
      %p81 = scmp.ne.s32.totalorder %s64, %s80
      %p82 = scmp.eq.s32.totalorder %s14, 0
      %p83 = por %p81, %p82
      %s84 = ssub.s32 %s15, %s27
      %p85 = scmp.eq.s32.totalorder %s84, 0
      %s87 = sadd.s32 %s86, 1
      %s88 = scalar_select %p85, %s86, %s87
      %p91 = pneg %p85
      %p92 = scmp.eq.s32.totalorder %s8, 1
      %p93 = por %p91, %p92
      %p94 = scmp.ne.s32.totalorder %s86, %s89
      %p95 = scmp.eq.s32.totalorder %s8, 0
      %p96 = por %p94, %p95
      %p97 = scmp.ne.s32.totalorder %s86, %s89
      %p98 = scmp.eq.s32.totalorder %s13, 1
      %p99 = por %p97, %p98
      %p100 = scmp.ne.s32.totalorder %s89, %s90
      %p101 = scmp.eq.s32.totalorder %s13, 0
      %p102 = por %p100, %p101
      %p103 = scmp.ne.s32.totalorder %s89, %s90
      %p104 = scmp.eq.s32.totalorder %s14, 1
      %p105 = por %p103, %p104
      %p107 = scmp.ne.s32.totalorder %s90, %s106
      %p108 = scmp.eq.s32.totalorder %s14, 0
      %p109 = por %p107, %p108
      %p110 = scmp.le.s32.totalorder 1, %s8
      %p111 = scmp.lt.s32.totalorder %s8, 3
      %p112 = pnand %p110, %p111
      %p113 = pneg %p112
      // Predicated region
      $region9: #{_loss_pipeline.1} parent=5 // pred_check
        _
      $region10: #{_loss_pipeline.1} parent=5 // pred_check_branch
        %115 = sbr.rel (%p112) target = $region12
      $region11: #{_loss_pipeline.1} parent=5 // pred_region
        %s116 = ssub.s32 %s8, 1
      $region12: #{_loss_pipeline.1} parent=5 // pred_fallthru
        _
      %p117 = scmp.lt.s32.totalorder %s8, 2
      // Predicated region
      $region13: #{_loss_pipeline.1} parent=5 // pred_check
        %p118 = pneg %p117
      $region14: #{_loss_pipeline.1} parent=5 // pred_check_branch
        %120 = sbr.rel (%p118) target = $region16
      $region15: #{_loss_pipeline.1} parent=5 // pred_region
        // Predicated region
        $region17: #{_loss_pipeline.1} parent=15 // pred_check
          %p121 = pneg %p42
        $region18: #{_loss_pipeline.1} parent=15 // pred_check_branch
          %123 = sbr.rel (%p121) target = $region20
        $region19: #{_loss_pipeline.1} parent=15 // pred_region
          %s124 = sand.u32 %s32, 1
          %s125 = sand.u32 %s32, 1
          %s126 = smul.addr %s125, 64
          %s127 = scalar_lea.vmem [#allocation4], %s126
          %s128 = sadd.s32 %s15, %s16
          %s129 = smul.addr %s128, 8
          %s130 = scalar_lea.vmem %s0, %s129
          // Predicated region
          $region21: #{_loss_pipeline.1} parent=19 // pred_check
            _
          $region22: #{_loss_pipeline.1} parent=19 // pred_check_branch
            %132 = sbr.rel (0) target = $region24
          $region23: #{_loss_pipeline.1} parent=19 // pred_region
            // Predicated region
            $region25: #{_loss_pipeline.1} parent=23 // pred_check
              _
            $region26: #{_loss_pipeline.1} parent=23 // pred_check_branch
              %134 = sbr.rel (0) target = $region28
            $region27: #{_loss_pipeline.1} parent=23 // pred_region
              // Predicated region
              $region40: #{_loss_pipeline.1} parent=27 // pred_check
                _
              $region41: #{_loss_pipeline.1} parent=27 // pred_check_branch
                %164 = sbr.rel (0) target = $region43
              $region42: #{_loss_pipeline.1} parent=27 // pred_region
                loop: start=0, step=1, limit=1
                $region44: #{_loss_pipeline.1} parent=42 // loop_pre_header
                  _
                $region45: #{_loss_pipeline.1} parent=42 // loop_header
                  %s166 = sphi 0, %s170
                  %p167 = scmp.ge.s32.totalorder %s166, 1
                  %s171 = sphi %s130, %s130
                  %s172 = sphi %s127, %s127
                $region46: #{_loss_pipeline.1} parent=42 // loop_header_branch
                  %169 = sbr.rel (%p167) target = $region50
                $region47: #{_loss_pipeline.1} parent=42 // loop_body
                  %v173 = vld [vmem:[%s171] sm:$0xff]
                  %174 = vst [vmem:[%s172] sm:$0xff] %v173
                  %v175 = vld [vmem:[%s171 + $0x10] sm:$0xff]
                  %176 = vst [vmem:[%s172 + $0x8] sm:$0xff] %v175
                  %v177 = vld [vmem:[%s171 + $0x20] sm:$0xff]
                  %178 = vst [vmem:[%s172 + $0x10] sm:$0xff] %v177
                  %v179 = vld [vmem:[%s171 + $0x30] sm:$0xff]
                  %180 = vst [vmem:[%s172 + $0x18] sm:$0xff] %v179
                  %v181 = vld [vmem:[%s171 + $0x40] sm:$0xff]
                  %182 = vst [vmem:[%s172 + $0x20] sm:$0xff] %v181
                  %v183 = vld [vmem:[%s171 + $0x50] sm:$0xff]
                  %184 = vst [vmem:[%s172 + $0x28] sm:$0xff] %v183
                  %v185 = vld [vmem:[%s171 + $0x60] sm:$0xff]
                  %186 = vst [vmem:[%s172 + $0x30] sm:$0xff] %v185
                  %v187 = vld [vmem:[%s171 + $0x70] sm:$0xff]
                  %188 = vst [vmem:[%s172 + $0x38] sm:$0xff] %v187
                $region48: #{_loss_pipeline.1} parent=42 // loop_footer
                  %s170 = sadd.s32 1, %s166
                $region49: #{_loss_pipeline.1} parent=42 // loop_footer_branch
                  %165 = sbr.rel target = $region45
                $region50: #{_loss_pipeline.1} parent=42 // loop_exit
                  _
              $region43: #{_loss_pipeline.1} parent=27 // pred_fallthru
                _
              // Predicated region
              $region51: #{_loss_pipeline.1} parent=27 // pred_check
                _
              $region52: #{_loss_pipeline.1} parent=27 // pred_check_branch
                %190 = sbr.rel target = $region54
              $region53: #{_loss_pipeline.1} parent=27 // pred_region
                _
              $region54: #{_loss_pipeline.1} parent=27 // pred_fallthru
                _
            $region28: #{_loss_pipeline.1} parent=23 // pred_fallthru
              _
            // Predicated region
            $region29: #{_loss_pipeline.1} parent=23 // pred_check
              _
            $region30: #{_loss_pipeline.1} parent=23 // pred_check_branch
              %136 = sbr.rel target = $region32
            $region31: #{_loss_pipeline.1} parent=23 // pred_region
              %s138 = ssub.s32 256, 1
              loop: start=0, step=1, limit=1
              $region33: #{_loss_pipeline.1} parent=31 // loop_pre_header
                _
              $region34: #{_loss_pipeline.1} parent=31 // loop_header
                %s140 = sphi 0, %s144
                %p141 = scmp.ge.s32.totalorder %s140, 1
                %s145 = sphi %s130, %s130
                %s146 = sphi %s127, %s127
              $region35: #{_loss_pipeline.1} parent=31 // loop_header_branch
                %143 = sbr.rel (%p141) target = $region39
              $region36: #{_loss_pipeline.1} parent=31 // loop_body
                %v147 = vld [vmem:[%s145] sm:%s138]
                %148 = vst [vmem:[%s146] sm:%s138] %v147
                %v149 = vld [vmem:[%s145 + $0x10] sm:%s138]
                %150 = vst [vmem:[%s146 + $0x8] sm:%s138] %v149
                %v151 = vld [vmem:[%s145 + $0x20] sm:%s138]
                %152 = vst [vmem:[%s146 + $0x10] sm:%s138] %v151
                %v153 = vld [vmem:[%s145 + $0x30] sm:%s138]
                %154 = vst [vmem:[%s146 + $0x18] sm:%s138] %v153
                %v155 = vld [vmem:[%s145 + $0x40] sm:%s138]
                %156 = vst [vmem:[%s146 + $0x20] sm:%s138] %v155
                %v157 = vld [vmem:[%s145 + $0x50] sm:%s138]
                %158 = vst [vmem:[%s146 + $0x28] sm:%s138] %v157
                %v159 = vld [vmem:[%s145 + $0x60] sm:%s138]
                %160 = vst [vmem:[%s146 + $0x30] sm:%s138] %v159
                %v161 = vld [vmem:[%s145 + $0x70] sm:%s138]
                %162 = vst [vmem:[%s146 + $0x38] sm:%s138] %v161
              $region37: #{_loss_pipeline.1} parent=31 // loop_footer
                %s144 = sadd.s32 1, %s140
              $region38: #{_loss_pipeline.1} parent=31 // loop_footer_branch
                %139 = sbr.rel target = $region34
              $region39: #{_loss_pipeline.1} parent=31 // loop_exit
                _
            $region32: #{_loss_pipeline.1} parent=23 // pred_fallthru
              _
          $region24: #{_loss_pipeline.1} parent=19 // pred_fallthru
            _
          %191 = vnop
        $region20: #{_loss_pipeline.1} parent=15 // pred_fallthru
          _
        // Predicated region
        $region55: #{_loss_pipeline.1} parent=15 // pred_check
          %p192 = pneg %p70
        $region56: #{_loss_pipeline.1} parent=15 // pred_check_branch
          %194 = sbr.rel (%p192) target = $region58
        $region57: #{_loss_pipeline.1} parent=15 // pred_region
          %s195 = sand.u32 %s60, 1
          %s196 = sand.u32 %s60, 1
          %s197 = smul.addr %s196, 24
          %s198 = scalar_lea.vmem [#allocation5], %s197
          %s199 = sadd.s32 %s15, %s16
          %s200 = smul.addr %s199, 8
          %s201 = scalar_lea.vmem %s1, %s200
          // Predicated region
          $region59: #{_loss_pipeline.1} parent=57 // pred_check
            _
          $region60: #{_loss_pipeline.1} parent=57 // pred_check_branch
            %203 = sbr.rel (0) target = $region62
          $region61: #{_loss_pipeline.1} parent=57 // pred_region
            // Predicated region
            $region63: #{_loss_pipeline.1} parent=61 // pred_check
              _
            $region64: #{_loss_pipeline.1} parent=61 // pred_check_branch
              %205 = sbr.rel (0) target = $region66
            $region65: #{_loss_pipeline.1} parent=61 // pred_region
              // Predicated region
              $region78: #{_loss_pipeline.1} parent=65 // pred_check
                _
              $region79: #{_loss_pipeline.1} parent=65 // pred_check_branch
                %225 = sbr.rel (0) target = $region81
              $region80: #{_loss_pipeline.1} parent=65 // pred_region
                loop: start=0, step=1, limit=1
                $region82: #{_loss_pipeline.1} parent=80 // loop_pre_header
                  _
                $region83: #{_loss_pipeline.1} parent=80 // loop_header
                  %s227 = sphi 0, %s231
                  %p228 = scmp.ge.s32.totalorder %s227, 1
                  %s232 = sphi %s201, %s201
                  %s233 = sphi %s198, %s198
                $region84: #{_loss_pipeline.1} parent=80 // loop_header_branch
                  %230 = sbr.rel (%p228) target = $region88
                $region85: #{_loss_pipeline.1} parent=80 // loop_body
                  %v234 = vld [vmem:[%s232] sm:$0xff]
                  %235 = vst [vmem:[%s233] sm:$0xff] %v234
                  %v236 = vld [vmem:[%s232 + $0x10] sm:$0xff]
                  %237 = vst [vmem:[%s233 + $0x8] sm:$0xff] %v236
                  %v238 = vld [vmem:[%s232 + $0x20] sm:$0xff]
                  %239 = vst [vmem:[%s233 + $0x10] sm:$0xff] %v238
                $region86: #{_loss_pipeline.1} parent=80 // loop_footer
                  %s231 = sadd.s32 1, %s227
                $region87: #{_loss_pipeline.1} parent=80 // loop_footer_branch
                  %226 = sbr.rel target = $region83
                $region88: #{_loss_pipeline.1} parent=80 // loop_exit
                  _
              $region81: #{_loss_pipeline.1} parent=65 // pred_fallthru
                _
              // Predicated region
              $region89: #{_loss_pipeline.1} parent=65 // pred_check
                _
              $region90: #{_loss_pipeline.1} parent=65 // pred_check_branch
                %241 = sbr.rel target = $region92
              $region91: #{_loss_pipeline.1} parent=65 // pred_region
                _
              $region92: #{_loss_pipeline.1} parent=65 // pred_fallthru
                _
            $region66: #{_loss_pipeline.1} parent=61 // pred_fallthru
              _
            // Predicated region
            $region67: #{_loss_pipeline.1} parent=61 // pred_check
              _
            $region68: #{_loss_pipeline.1} parent=61 // pred_check_branch
              %207 = sbr.rel target = $region70
            $region69: #{_loss_pipeline.1} parent=61 // pred_region
              %s209 = ssub.s32 256, 1
              loop: start=0, step=1, limit=1
              $region71: #{_loss_pipeline.1} parent=69 // loop_pre_header
                _
              $region72: #{_loss_pipeline.1} parent=69 // loop_header
                %s211 = sphi 0, %s215
                %p212 = scmp.ge.s32.totalorder %s211, 1
                %s216 = sphi %s201, %s201
                %s217 = sphi %s198, %s198
              $region73: #{_loss_pipeline.1} parent=69 // loop_header_branch
                %214 = sbr.rel (%p212) target = $region77
              $region74: #{_loss_pipeline.1} parent=69 // loop_body
                %v218 = vld [vmem:[%s216] sm:%s209]
                %219 = vst [vmem:[%s217] sm:%s209] %v218
                %v220 = vld [vmem:[%s216 + $0x10] sm:%s209]
                %221 = vst [vmem:[%s217 + $0x8] sm:%s209] %v220
                %v222 = vld [vmem:[%s216 + $0x20] sm:%s209]
                %223 = vst [vmem:[%s217 + $0x10] sm:%s209] %v222
              $region75: #{_loss_pipeline.1} parent=69 // loop_footer
                %s215 = sadd.s32 1, %s211
              $region76: #{_loss_pipeline.1} parent=69 // loop_footer_branch
                %210 = sbr.rel target = $region72
              $region77: #{_loss_pipeline.1} parent=69 // loop_exit
                _
            $region70: #{_loss_pipeline.1} parent=61 // pred_fallthru
              _
          $region62: #{_loss_pipeline.1} parent=57 // pred_fallthru
            _
          %242 = vnop
        $region58: #{_loss_pipeline.1} parent=15 // pred_fallthru
          _
      $region16: #{_loss_pipeline.1} parent=5 // pred_fallthru
        _
      %p243 = scmp.le.s32.totalorder 1, %s8
      %p244 = scmp.lt.s32.totalorder %s8, 3
      %p245 = pnand %p243, %p244
      %p246 = pneg %p245
      // Predicated region
      $region93: #{_loss_pipeline.1} parent=5 // pred_check
        _
      $region94: #{_loss_pipeline.1} parent=5 // pred_check_branch
        %248 = sbr.rel (%p245) target = $region96
      $region95: #{_loss_pipeline.1} parent=5 // pred_region
        %s249 = ssub.s32 %s8, 1
        %s250 = sand.u32 %s35, 1
        %s251 = sand.u32 %s35, 1
        %s252 = smul.addr %s251, 64
        %s253 = scalar_lea.vmem [#allocation4], %s252
        // Predicated region
        $region97: #{_loss_pipeline.1} parent=95 // pred_check
          %p254 = pneg %p48
        $region98: #{_loss_pipeline.1} parent=95 // pred_check_branch
          %256 = sbr.rel (%p254) target = $region100
        $region99: #{_loss_pipeline.1} parent=95 // pred_region
          _
        $region100: #{_loss_pipeline.1} parent=95 // pred_fallthru
          _
        %s257 = sand.u32 %s63, 1
        %s258 = sand.u32 %s63, 1
        %s259 = smul.addr %s258, 24
        %s260 = scalar_lea.vmem [#allocation5], %s259
        // Predicated region
        $region101: #{_loss_pipeline.1} parent=95 // pred_check
          %p261 = pneg %p76
        $region102: #{_loss_pipeline.1} parent=95 // pred_check_branch
          %263 = sbr.rel (%p261) target = $region104
        $region103: #{_loss_pipeline.1} parent=95 // pred_region
          _
        $region104: #{_loss_pipeline.1} parent=95 // pred_fallthru
          _
        %s264 = sand.u32 %s35, 1
        %s265 = sand.u32 %s35, 1
        %s266 = smul.addr %s265, 64
        %s267 = scalar_lea.vmem [#allocation4], %s266
        %p268 = pneg %p48
        %p269 = pneg %p45
        %s270 = sand.u32 %s63, 1
        %s271 = sand.u32 %s63, 1
        %s272 = smul.addr %s271, 24
        %s273 = scalar_lea.vmem [#allocation5], %s272
        %p274 = pneg %p76
        %p275 = pneg %p73
        %p276 = pneg %p102
        %p277 = pneg %p99
        %p278 = scmp.lt.s32.totalorder %s17, 1
        %s279 = scalar_select %p278, %s17, 1
        %s280 = smul.addr %s279, 8
        %s281 = scalar_lea.vmem %s2, %s280
        %s282 = sadd.s32 %s17, %s18
        %s283 = sadd.s32 %s17, %s18
        %p284 = scmp.lt.s32.totalorder %s17, 1
        %s285 = scalar_select %p284, %s17, 1
        %s286 = smul.addr %s285, 8
        %s287 = scalar_lea.vmem %s2, %s286
        %p288 = scmp.eq.s32.totalorder %s18, 0
        // Predicated region
        $region105: #{_loss_pipeline.1} parent=95 // pred_check
          %p289 = pneg %p288
        $region106: #{_loss_pipeline.1} parent=95 // pred_check_branch
          %291 = sbr.rel (%p289) target = $region108
        $region107: #{_loss_pipeline.1} parent=95 // pred_region
          %292 = vst [vmem:[#allocation2] sm:$0xff] 0.0
          %293 = vst [vmem:[#allocation2 + $0x8] sm:$0xff] 0.0
          %294 = vst [vmem:[#allocation2 + $0x10] sm:$0xff] 0.0
          %295 = vst [vmem:[#allocation2 + $0x18] sm:$0xff] 0.0
          %296 = vst [vmem:[#allocation2 + $0x20] sm:$0xff] 0.0
          %297 = vst [vmem:[#allocation2 + $0x28] sm:$0xff] 0.0
          %298 = vst [vmem:[#allocation2 + $0x30] sm:$0xff] 0.0
          %299 = vst [vmem:[#allocation3] sm:$0xff] 0.0
        $region108: #{_loss_pipeline.1} parent=95 // pred_fallthru
          _
        %v300 = vld [vmem:[%s253] sm:$0xff]
        %v301 = vld [vmem:[%s253 + $0x8] sm:$0xff]
        %v302 = vld [vmem:[%s253 + $0x10] sm:$0xff]
        %v303 = vld [vmem:[%s253 + $0x18] sm:$0xff]
        %v304 = vld [vmem:[%s253 + $0x20] sm:$0xff]
        %v305 = vld [vmem:[%s253 + $0x28] sm:$0xff]
        %v306 = vld [vmem:[%s253 + $0x30] sm:$0xff]
        %v307 = vld [vmem:[%s253 + $0x38] sm:$0xff]
        %s308 = sadd.s32 %s17, %s18
        %s309 = smul.u32 %s308, 128
        %v310 = vlaneseq
        %v311 = vshrl.u32 %v310, 7
        %v312 = vlaneseq
        %v313 = vand.u32 %v312, 127
        %v314 = vstv %s309
        %v315 = vadd.s32 %v313, %v314
        %v316 = vmul.u32 %v311, 256
        %v317 = vadd.s32 %v316, %v315
        %vm318 = vcmp.lt.s32.totalorder %v317, 1000
        %v319 = vsel %vm318, 1, 0
        %v320 = vcvt.s32.f32 %v319
        %vm321 = vcmp.ne.f32.partialorder %v300, %v300
        %vm322 = vcmp.ne.f32.partialorder %v301, %v301
        %vm323 = vmor %vm321, %vm322
        %vm324 = vcmp.ne.f32.partialorder %v302, %v302
        %vm325 = vmor %vm323, %vm324
        %v326 = vsel %vm325, 0.0, %v320
        %v327 = vsel %vm321, 0.0, %v300
        %v328 = vsub.f32 %v327, %v303
        %v329 = vand.u32 2147483647, %v328
        %v330 = vsel %vm322, 0.0, %v301
        %v331 = vsub.f32 %v330, %v304
        %v332 = vand.u32 2147483647, %v331
        %v333 = vadd.f32 %v329, %v332
        %v334 = vsel %vm324, 0.0, %v302
        %v335 = vsub.f32 %v334, %v305
        %v336 = vand.u32 2147483647, %v335
        %v337 = vadd.f32 %v333, %v336
        %v338 = vmul.f32 %v337, %v326
        %v339 = vadd.f32 %v306, 1e-06
        %v340 = vlog2.pop %v339
        %v341 = vmul.f32 %v340, 0.6931472
        %v342 = vmul.f32 %v306, %v341
        %v343 = vsub.f32 1.0, %v306
        %v344 = vadd.f32 %v343, 1e-06
        %v345 = vlog2.pop %v344
        %v346 = vmul.f32 %v345, 0.6931472
        %v347 = vmul.f32 %v343, %v346
        %v348 = vadd.f32 %v342, %v347
        %v349 = vmul.f32 %v348, %v320
        %vm350 = vcmp.ge.f32.partialorder %v307, 2.0
        %v351 = vsel %vm350, 1.0, 0.0
        %vm352 = vcmp.eq.f32.partialorder %v307, 1.0
        %vm353 = vcmp.eq.f32.partialorder %v307, 3.0
        %vm354 = vmor %vm352, %vm353
        %v355 = vsel %vm354, 1.0, 0.0
        %v356 = vld [vmem:[#allocation2] sm:$0xff]
        %v357 = vadd.f32 %v356, %v338
        %358 = vst [vmem:[#allocation2] sm:$0xff] %v357
        %v359 = vld [vmem:[#allocation2 + $0x8] sm:$0xff]
        %v360 = vadd.f32 %v359, %v326
        %361 = vst [vmem:[#allocation2 + $0x8] sm:$0xff] %v360
        %v362 = vld [vmem:[#allocation2 + $0x10] sm:$0xff]
        %v363 = vadd.f32 %v362, %v349
        %364 = vst [vmem:[#allocation2 + $0x10] sm:$0xff] %v363
        %v365 = vld [vmem:[#allocation2 + $0x18] sm:$0xff]
        %v366 = vand.u32 2147483647, %v306
        %v367 = vmul.f32 %v366, %v355
        %v368 = vadd.f32 %v365, %v367
        %369 = vst [vmem:[#allocation2 + $0x18] sm:$0xff] %v368
        %v370 = vld [vmem:[#allocation2 + $0x20] sm:$0xff]
        %v371 = vadd.f32 %v370, %v355
        %372 = vst [vmem:[#allocation2 + $0x20] sm:$0xff] %v371
        %v373 = vld [vmem:[#allocation2 + $0x28] sm:$0xff]
        %v374 = vsub.f32 %v306, 1.0
        %v375 = vand.u32 2147483647, %v374
        %v376 = vmul.f32 %v375, %v351
        %v377 = vadd.f32 %v373, %v376
        %378 = vst [vmem:[#allocation2 + $0x28] sm:$0xff] %v377
        %v379 = vld [vmem:[#allocation2 + $0x30] sm:$0xff]
        %v380 = vadd.f32 %v379, %v351
        %381 = vst [vmem:[#allocation2 + $0x30] sm:$0xff] %v380
        %v382 = vld [vmem:[%s260] sm:$0xff]
        %v383 = vld [vmem:[%s260 + $0x8] sm:$0xff]
        %v384 = vld [vmem:[%s260 + $0x10] sm:$0xff]
        %vm385 = vcmp.lt.s32.totalorder %v317, 517
        %v386 = vsel %vm385, 1, 0
        %v387 = vcvt.s32.f32 %v386
        %v388 = vmul.f32 %v382, %v382
        %v389 = vmul.f32 %v383, %v383
        %v390 = vadd.f32 %v388, %v389
        %v391 = vmul.f32 %v384, %v384
        %v392 = vadd.f32 %v390, %v391
        %v393 = vrsqrt.pop %v392
        %v394 = vmul.f32 %v392, %v393
        %vm395 = vcmp.eq.f32.partialorder %v392, inf
        %v396 = vsel %vm395, %v392, %v394
        %vm397 = vcmp.eq.f32.partialorder %v392, 0.0
        %v398 = vand.u32 %v392, 2147483648
        %v399 = vsel %vm397, %v398, %v396
        %v400 = vld [vmem:[#allocation3] sm:$0xff]
        %v401 = vsub.f32 %v399, 1.0
        %v402 = vmul.f32 %v401, %v401
        %v403 = vmul.f32 %v402, %v387
        %v404 = vadd.f32 %v400, %v403
        %405 = vst [vmem:[#allocation3] sm:$0xff] %v404
        // Predicated region
        $region109: #{_loss_pipeline.1} parent=95 // pred_check
          %p406 = pneg %p288
        $region110: #{_loss_pipeline.1} parent=95 // pred_check_branch
          %408 = sbr.rel (%p406) target = $region112
        $region111: #{_loss_pipeline.1} parent=95 // pred_region
          %v409 = vld [vmem:[#allocation2] sm:$0xff]
          %410 = vadd.xlane.f32.xlu0 %v409
          %v411 = vpop.xlane.xlu0 %410
          %v412 = vrot.slane %v411, 4
          %v413 = vadd.f32 %v411, %v412
          %v414 = vrot.slane %v413, 2
          %v415 = vadd.f32 %v413, %v414
          %v416 = vrot.slane %v415, 1
          %v417 = vadd.f32 %v415, %v416
          %s418 = vtos %v417
          %v419 = vstv %s418
          %420 = vst [vmem:[%s287] sm:$0x1] %v419
          %v421 = vld [vmem:[#allocation2 + $0x8] sm:$0xff]
          %422 = vadd.xlane.f32.xlu0 %v421
          %v423 = vpop.xlane.xlu0 %422
          %v424 = vrot.slane %v423, 4
          %v425 = vadd.f32 %v423, %v424
          %v426 = vrot.slane %v425, 2
          %v427 = vadd.f32 %v425, %v426
          %v428 = vrot.slane %v427, 1
          %v429 = vadd.f32 %v427, %v428
          %s430 = vtos %v429
          %v431 = vstv %s430
          %432 = vst [vmem:[%s287 + $0x1] sm:$0x1] %v431
          %v433 = vld [vmem:[#allocation2 + $0x10] sm:$0xff]
          %434 = vadd.xlane.f32.xlu0 %v433
          %v435 = vpop.xlane.xlu0 %434
          %v436 = vrot.slane %v435, 4
          %v437 = vadd.f32 %v435, %v436
          %v438 = vrot.slane %v437, 2
          %v439 = vadd.f32 %v437, %v438
          %v440 = vrot.slane %v439, 1
          %v441 = vadd.f32 %v439, %v440
          %s442 = vtos %v441
          %v443 = vstv %s442
          %444 = vst [vmem:[%s287 + $0x2] sm:$0x1] %v443
          %v445 = vld [vmem:[#allocation2 + $0x18] sm:$0xff]
          %446 = vadd.xlane.f32.xlu0 %v445
          %v447 = vpop.xlane.xlu0 %446
          %v448 = vrot.slane %v447, 4
          %v449 = vadd.f32 %v447, %v448
          %v450 = vrot.slane %v449, 2
          %v451 = vadd.f32 %v449, %v450
          %v452 = vrot.slane %v451, 1
          %v453 = vadd.f32 %v451, %v452
          %s454 = vtos %v453
          %v455 = vstv %s454
          %456 = vst [vmem:[%s287 + $0x3] sm:$0x1] %v455
          %v457 = vld [vmem:[#allocation2 + $0x20] sm:$0xff]
          %458 = vadd.xlane.f32.xlu0 %v457
          %v459 = vpop.xlane.xlu0 %458
          %v460 = vrot.slane %v459, 4
          %v461 = vadd.f32 %v459, %v460
          %v462 = vrot.slane %v461, 2
          %v463 = vadd.f32 %v461, %v462
          %v464 = vrot.slane %v463, 1
          %v465 = vadd.f32 %v463, %v464
          %s466 = vtos %v465
          %v467 = vstv %s466
          %468 = vst [vmem:[%s287 + $0x4] sm:$0x1] %v467
          %v469 = vld [vmem:[#allocation2 + $0x28] sm:$0xff]
          %470 = vadd.xlane.f32.xlu0 %v469
          %v471 = vpop.xlane.xlu0 %470
          %v472 = vrot.slane %v471, 4
          %v473 = vadd.f32 %v471, %v472
          %v474 = vrot.slane %v473, 2
          %v475 = vadd.f32 %v473, %v474
          %v476 = vrot.slane %v475, 1
          %v477 = vadd.f32 %v475, %v476
          %s478 = vtos %v477
          %v479 = vstv %s478
          %480 = vst [vmem:[%s287 + $0x5] sm:$0x1] %v479
          %v481 = vld [vmem:[#allocation2 + $0x30] sm:$0xff]
          %482 = vadd.xlane.f32.xlu0 %v481
          %v483 = vpop.xlane.xlu0 %482
          %v484 = vrot.slane %v483, 4
          %v485 = vadd.f32 %v483, %v484
          %v486 = vrot.slane %v485, 2
          %v487 = vadd.f32 %v485, %v486
          %v488 = vrot.slane %v487, 1
          %v489 = vadd.f32 %v487, %v488
          %s490 = vtos %v489
          %v491 = vstv %s490
          %492 = vst [vmem:[%s287 + $0x6] sm:$0x1] %v491
          %v493 = vld [vmem:[#allocation3] sm:$0xff]
          %494 = vadd.xlane.f32.xlu0 %v493
          %v495 = vpop.xlane.xlu0 %494
          %v496 = vrot.slane %v495, 4
          %v497 = vadd.f32 %v495, %v496
          %v498 = vrot.slane %v497, 2
          %v499 = vadd.f32 %v497, %v498
          %v500 = vrot.slane %v499, 1
          %v501 = vadd.f32 %v499, %v500
          %s502 = vtos %v501
          %v503 = vstv %s502
          %504 = vst [vmem:[%s287 + $0x7] sm:$0x1] %v503
        $region112: #{_loss_pipeline.1} parent=95 // pred_fallthru
          _
        %p505 = scmp.lt.s32.totalorder %s17, 1
        %s506 = scalar_select %p505, %s17, 1
        %s507 = smul.addr %s506, 8
        %s508 = scalar_lea.vmem %s2, %s507
        // Predicated region
        $region113: #{_loss_pipeline.1} parent=95 // pred_check
          %p509 = pneg %p99
        $region114: #{_loss_pipeline.1} parent=95 // pred_check_branch
          %511 = sbr.rel (%p509) target = $region116
        $region115: #{_loss_pipeline.1} parent=95 // pred_region
          _
        $region116: #{_loss_pipeline.1} parent=95 // pred_fallthru
          _
      $region96: #{_loss_pipeline.1} parent=5 // pred_fallthru
        _
      %p512 = scmp.le.s32.totalorder 2, %s8
      // Predicated region
      $region117: #{_loss_pipeline.1} parent=5 // pred_check
        %p513 = pneg %p512
      $region118: #{_loss_pipeline.1} parent=5 // pred_check_branch
        %515 = sbr.rel (%p513) target = $region120
      $region119: #{_loss_pipeline.1} parent=5 // pred_region
        %s516 = ssub.s32 %s8, 2
        // Predicated region
        $region121: #{_loss_pipeline.1} parent=119 // pred_check
          %p517 = pneg %p105
        $region122: #{_loss_pipeline.1} parent=119 // pred_check_branch
          %519 = sbr.rel (%p517) target = $region124
        $region123: #{_loss_pipeline.1} parent=119 // pred_region
          %p520 = scmp.lt.s32.totalorder %s19, 1
          %s521 = scalar_select %p520, %s19, 1
          %s522 = smul.addr %s521, 8
          %s523 = scalar_lea.vmem %s2, %s522
        $region124: #{_loss_pipeline.1} parent=119 // pred_fallthru
          _
      $region120: #{_loss_pipeline.1} parent=5 // pred_fallthru
        _
    $region6: #{_loss_pipeline.1} parent=1 // loop_footer
      %s12 = sadd.s32 1, %s8
    $region7: #{_loss_pipeline.1} parent=1 // loop_footer_branch
      %7 = sbr.rel target = $region3
    $region8: #{_loss_pipeline.1} parent=1 // loop_exit
      _

</llo_original>
